<compile_context>
chip_gen: v7x
topology: tpu7x:2x2x1
jax: 0.10.0
libtpu: 0.0.40
codegen_flags: <defaults>
</compile_context>

<pallas_src>
import functools
import math

import jax
import jax.numpy as jnp
from jax import lax
from jax.experimental import pallas as pl
from jax.experimental.pallas import tpu as pltpu

_EPS = 1e-5
_MASK_NEG = -0.7 * float(jnp.finfo(jnp.float32).max)   # finite "-inf": NaN-safe online softmax
_M_INIT = -1e30                                        # finite running-max init
_VMEM_LIMIT = 48 * 1024 * 1024                         # < v7x 64MiB physical, > 32MiB default


def _rmsnorm(x, w, eps=_EPS):
    # x: (T, D) f32, w: (D,) f32
    ms = jnp.mean(x * x, axis=-1, keepdims=True)
    return x / jnp.sqrt(ms + eps) * w


# --------------------- kernel A: RMSNorm1 + QKV (head-streamed) ---------------------
def _qkv_kernel(x_ref, ln1_ref, wq_ref, wk_ref, wv_ref, q_ref, k_ref, v_ref,
                xn_ref, *, compute_dtype):
    h = pl.program_id(2)

    @pl.when(h == 0)
    def _():
        x = x_ref[0].astype(jnp.float32)
        xn_ref[...] = _rmsnorm(x, ln1_ref[0].astype(jnp.float32)).astype(compute_dtype)

    xn = xn_ref[...]                                            # (TQ1, D) compute_dtype
    q_ref[0, 0] = jnp.dot(xn, wq_ref[0],
                          preferred_element_type=jnp.float32).astype(q_ref.dtype)
    k_ref[0, 0] = jnp.dot(xn, wk_ref[0],
                          preferred_element_type=jnp.float32).astype(k_ref.dtype)
    v_ref[0, 0] = jnp.dot(xn, wv_ref[0],
                          preferred_element_type=jnp.float32).astype(v_ref.dtype)


# ---------------------- kernel B: causal flash attention (heads batched) ------------
def _flash_attn_kernel(q_ref, k_ref, v_ref, o_ref, m_ref, l_ref, acc_ref, *,
                       compute_dtype, tq, tkv):
    i = pl.program_id(1)   # q tile
    j = pl.program_id(2)   # kv tile

    @pl.when(j == 0)
    def _init():
        m_ref[...] = jnp.full_like(m_ref, _M_INIT)
        l_ref[...] = jnp.zeros_like(l_ref)
        acc_ref[...] = jnp.zeros_like(acc_ref)

    def _accumulate(masked):
        q = q_ref[0]                                            # (H, TQ, dk), q pre-scaled via Wq
        k = k_ref[0]                                            # (H, TKV, dk)
        v = v_ref[0]                                            # (H, TKV, dk)
        # heads-batched QK^T: (H, TQ, TKV), f32 accumulation on the MXU
        s = lax.dot_general(q, k, (((2,), (2,)), ((0,), (0,))),
                            preferred_element_type=jnp.float32)
        if masked:  # only the diagonal tile builds/applies the mask (TQ == TKV)
            rr = lax.broadcasted_iota(jnp.int32, (tq, tkv), 0)
            cc = lax.broadcasted_iota(jnp.int32, (tq, tkv), 1)
            s = s + jnp.where(cc > rr, _MASK_NEG, 0.0).astype(jnp.float32)[None]
        m_prev = m_ref[...]                                     # (H, TQ, 1)
        m_new = jnp.maximum(m_prev, jnp.max(s, axis=-1, keepdims=True))
        alpha = jnp.exp(m_prev - m_new)
        p = jnp.exp(s - m_new)
        l_ref[...] = alpha * l_ref[...] + jnp.sum(p, axis=-1, keepdims=True)
        pv = lax.dot_general(p.astype(compute_dtype), v,
                             (((2,), (1,)), ((0,), (0,))),
                             preferred_element_type=jnp.float32)  # (H, TQ, dk)
        acc_ref[...] = alpha * acc_ref[...] + pv
        m_ref[...] = m_new

    @pl.when(j < i)          # strictly-lower tiles: no mask needed
    def _interior():
        _accumulate(False)

    @pl.when(j == i)         # diagonal tile: mask, then finalize (last useful kv tile)
    def _diag_and_finalize():
        _accumulate(True)
        inv = pl.reciprocal(l_ref[...], approx=compute_dtype != jnp.float32)
        o_ref[0] = (acc_ref[...] * inv).astype(o_ref.dtype)
    # j > i: nothing (index_map clamp means no DMA was issued either)


# ------------- kernel C: out-projection (Wo streamed per head) + res1 + RMSNorm2 ----
def _outproj_kernel(x_ref, o_ref, ln2_ref, wo_ref, sub1_ref, yn_ref, acc_ref, *,
                    compute_dtype):
    h = pl.program_id(2)
    nh = pl.num_programs(2)

    @pl.when(h == 0)
    def _init():
        acc_ref[...] = x_ref[0].astype(jnp.float32)             # residual 1 folded into acc

    acc_ref[...] += jnp.dot(o_ref[0, 0], wo_ref[0],
                            preferred_element_type=jnp.float32)  # (TR, dk) @ (dk, D)

    @pl.when(h == nh - 1)
    def _finalize():
        sub1 = acc_ref[...]
        sub1_ref[0] = sub1.astype(sub1_ref.dtype)
        yn_ref[0] = _rmsnorm(sub1, ln2_ref[0].astype(jnp.float32)).astype(yn_ref.dtype)


# -------------------- kernel D: FFN (F-streamed) + residual 2 -----------------------
def _ffn_kernel(yn_ref, sub1_ref, w1_ref, w2_ref, out_ref, acc_ref, *, compute_dtype):
    f = pl.program_id(2)
    nf = pl.num_programs(2)

    @pl.when(f == 0)
    def _init():
        acc_ref[...] = sub1_ref[0].astype(jnp.float32)          # residual 2 folded into acc

    h = jnp.dot(yn_ref[0], w1_ref[...], preferred_element_type=jnp.float32)  # (TR, FT)
    h = 0.5 * h * (1.0 + lax.erf(h * (1.0 / math.sqrt(2.0))))   # exact GELU (spec)
    acc_ref[...] += jnp.dot(h.astype(compute_dtype), w2_ref[...],
                            preferred_element_type=jnp.float32)

    @pl.when(f == nf - 1)
    def _finalize():
        out_ref[0] = acc_ref[...].astype(out_ref.dtype)


# -------------------------------------- wrapper --------------------------------------
def _pick_row_tile(n, target):
    # largest divisor of n that is <= target and a multiple of 8; else the full dim.
    for t in range(min(n, target), 7, -1):
        if n % t == 0 and t % 8 == 0:
            return t
    return n


def _pick_lane_tile(n, target):
    # largest multiple-of-128 divisor of n that is <= target; else the full dim.
    t = (min(n, target) // 128) * 128
    while t >= 128:
        if n % t == 0:
            return t
        t -= 128
    return n


def _cparams(*sem):
    return pltpu.CompilerParams(dimension_semantics=sem, vmem_limit_bytes=_VMEM_LIMIT)


def transformer_block(x, params, num_heads, compute_dtype=jnp.bfloat16):
    B, T, D = x.shape
    F = params["w1"].shape[1]
    assert D % num_heads == 0
    H = num_heads
    dk = D // H
    cd = compute_dtype

    TQ1 = _pick_row_tile(T, 512)   # QKV kernel row tile (plain streaming matmul -> big)
    TQA = _pick_row_tile(T, 256)   # attention q/kv tile (256 fills v6e/v7x MXU)
    TR = _pick_row_tile(T, 256)    # out-proj / FFN row tile
    FT = _pick_lane_tile(F, 512)   # FFN hidden-dim tile

    # Host-side weight prep (one-time): head-major slices, q-scale folded into Wq.
    scale = 1.0 / math.sqrt(dk)
    wq_h = (params["wq"] * scale).reshape(D, H, dk).transpose(1, 0, 2).astype(cd)  # (H, D, dk)
    wk_h = params["wk"].reshape(D, H, dk).transpose(1, 0, 2).astype(cd)            # (H, D, dk)
    wv_h = params["wv"].reshape(D, H, dk).transpose(1, 0, 2).astype(cd)            # (H, D, dk)
    wo_h = params["wo"].reshape(H, dk, D).astype(cd)                               # (H, dk, D)
    w1 = params["w1"].astype(cd)                                                   # (D, F)
    w2 = params["w2"].astype(cd)                                                   # (F, D)
    ln1 = params["ln1"].astype(jnp.float32)[None, :]
    ln2 = params["ln2"].astype(jnp.float32)[None, :]

    # ---- kernel A: RMSNorm1 + QKV (weights streamed per head) ----
    qkv_call = pl.pallas_call(
        functools.partial(_qkv_kernel, compute_dtype=cd),
        out_shape=(jax.ShapeDtypeStruct((B, H, T, dk), cd),) * 3,
        grid_spec=pltpu.PrefetchScalarGridSpec(
            num_scalar_prefetch=0,
            grid=(B, T // TQ1, H),
            in_specs=[
                pl.BlockSpec((1, TQ1, D), lambda b, i, h: (b, i, 0)),   # x
                pl.BlockSpec((1, D), lambda b, i, h: (0, 0)),           # ln1
                pl.BlockSpec((1, D, dk), lambda b, i, h: (h, 0, 0)),    # Wq head slice
                pl.BlockSpec((1, D, dk), lambda b, i, h: (h, 0, 0)),    # Wk head slice
                pl.BlockSpec((1, D, dk), lambda b, i, h: (h, 0, 0)),    # Wv head slice
            ],
            out_specs=[pl.BlockSpec((1, 1, TQ1, dk), lambda b, i, h: (b, h, i, 0))
                       for _ in range(3)],
            scratch_shapes=[pltpu.VMEM((TQ1, D), cd)],                  # xn (RMSNorm'd x)
        ),
        compiler_params=_cparams("parallel", "parallel", "arbitrary"),
    )
    q, k, v = qkv_call(x, ln1, wq_h, wk_h, wv_h)

    # ---- kernel B: causal flash attention (heads batched, dead tiles skip DMA) ----
    attn_call = pl.pallas_call(
        functools.partial(_flash_attn_kernel, compute_dtype=cd, tq=TQA, tkv=TQA),
        out_shape=jax.ShapeDtypeStruct((B, H, T, dk), cd),
        grid_spec=pltpu.PrefetchScalarGridSpec(
            num_scalar_prefetch=0,
            grid=(B, T // TQA, T // TQA),
            in_specs=[
                pl.BlockSpec((1, H, TQA, dk), lambda b, i, j: (b, 0, i, 0)),
                # clamp to causal range: j > i reuses block i -> no DMA for dead tiles
                pl.BlockSpec((1, H, TQA, dk),
                             lambda b, i, j: (b, 0, jnp.minimum(i, j), 0)),
                pl.BlockSpec((1, H, TQA, dk),
                             lambda b, i, j: (b, 0, jnp.minimum(i, j), 0)),
            ],
            out_specs=pl.BlockSpec((1, H, TQA, dk), lambda b, i, j: (b, 0, i, 0)),
            scratch_shapes=[
                pltpu.VMEM((H, TQA, 1), jnp.float32),    # running max m
                pltpu.VMEM((H, TQA, 1), jnp.float32),    # running sum l
                pltpu.VMEM((H, TQA, dk), jnp.float32),   # attention accumulator
            ],
        ),
        compiler_params=_cparams("parallel", "parallel", "arbitrary"),
    )
    o = attn_call(q, k, v)

    # ---- kernel C: output projection (Wo streamed per head) + residual1 + RMSNorm2 ----
    outproj_call = pl.pallas_call(
        functools.partial(_outproj_kernel, compute_dtype=cd),
        out_shape=(jax.ShapeDtypeStruct((B, T, D), jnp.float32),   # sub1 (residual stream)
                   jax.ShapeDtypeStruct((B, T, D), cd)),           # yn = RMSNorm2(sub1)
        grid_spec=pltpu.PrefetchScalarGridSpec(
            num_scalar_prefetch=0,
            grid=(B, T // TR, H),
            in_specs=[
                pl.BlockSpec((1, TR, D), lambda b, i, h: (b, i, 0)),        # x (residual)
                pl.BlockSpec((1, 1, TR, dk), lambda b, i, h: (b, h, i, 0)), # o head slice
                pl.BlockSpec((1, D), lambda b, i, h: (0, 0)),               # ln2
                pl.BlockSpec((1, dk, D), lambda b, i, h: (h, 0, 0)),        # Wo head slice
            ],
            out_specs=[pl.BlockSpec((1, TR, D), lambda b, i, h: (b, i, 0)),
                       pl.BlockSpec((1, TR, D), lambda b, i, h: (b, i, 0))],
            scratch_shapes=[pltpu.VMEM((TR, D), jnp.float32)],
        ),
        compiler_params=_cparams("parallel", "parallel", "arbitrary"),
    )
    sub1, yn = outproj_call(x, o, ln2, wo_h)

    # ---- kernel D: FFN (W1/W2 streamed over F tiles) + residual 2 ----
    ffn_call = pl.pallas_call(
        functools.partial(_ffn_kernel, compute_dtype=cd),
        out_shape=jax.ShapeDtypeStruct((B, T, D), x.dtype),
        grid_spec=pltpu.PrefetchScalarGridSpec(
            num_scalar_prefetch=0,
            grid=(B, T // TR, F // FT),
            in_specs=[
                pl.BlockSpec((1, TR, D), lambda b, i, f: (b, i, 0)),   # yn
                pl.BlockSpec((1, TR, D), lambda b, i, f: (b, i, 0)),   # sub1 (residual)
                pl.BlockSpec((D, FT), lambda b, i, f: (0, f)),         # W1 column tile
                pl.BlockSpec((FT, D), lambda b, i, f: (f, 0)),         # W2 row tile
            ],
            out_specs=pl.BlockSpec((1, TR, D), lambda b, i, f: (b, i, 0)),
            scratch_shapes=[pltpu.VMEM((TR, D), jnp.float32)],
        ),
        compiler_params=_cparams("parallel", "parallel", "arbitrary"),
    )
    return ffn_call(yn, sub1, w1, w2)


# ---------------- pure-JAX reference (mirrors the PyTorch module) ----------------
def reference_block(x, params, num_heads):
    def rms(v, w, eps=_EPS):
        return v / jnp.sqrt(jnp.mean(v * v, axis=-1, keepdims=True) + eps) * w

    B, T, D = x.shape
    dk = D // num_heads
    xn = rms(x, params["ln1"])
    q = xn @ params["wq"]
    k = xn @ params["wk"]
    v = xn @ params["wv"]
    qh = q.reshape(B, T, num_heads, dk).transpose(0, 2, 1, 3)
    kh = k.reshape(B, T, num_heads, dk).transpose(0, 2, 1, 3)
    vh = v.reshape(B, T, num_heads, dk).transpose(0, 2, 1, 3)
    s = jnp.einsum("bhtd,bhsd->bhts", qh, kh) / math.sqrt(dk)
    mask = jnp.triu(jnp.ones((T, T), bool), k=1)
    s = s + jnp.where(mask, -jnp.inf, 0.0)
    s = s - jnp.max(s, axis=-1, keepdims=True)
    e = jnp.exp(s)
    a = e / jnp.sum(e, axis=-1, keepdims=True)
    o = jnp.einsum("bhts,bhsd->bhtd", a, vh).transpose(0, 2, 1, 3).reshape(B, T, D)
    attn_out = o @ params["wo"]
    sub1 = x + attn_out
    yn = rms(sub1, params["ln2"])
    h = yn @ params["w1"]
    h = h * (1.0 + lax.erf(h / jnp.sqrt(2.0))) / 2.0
    return h @ params["w2"] + sub1


def init_params(key, d_model, d_fnn):
    def lin(k, fan_in, shape):
        bound = 1.0 / math.sqrt(fan_in)
        return jax.random.uniform(k, shape, jnp.float32, -bound, bound)

    ks = jax.random.split(key, 6)
    return {
        "ln1": jnp.ones((d_model,), jnp.float32),
        "ln2": jnp.ones((d_model,), jnp.float32),
        # stored pre-transposed: y = x @ W  (equivalent to torch x @ weight.T)
        "wq": lin(ks[0], d_model, (d_model, d_model)),
        "wk": lin(ks[1], d_model, (d_model, d_model)),
        "wv": lin(ks[2], d_model, (d_model, d_model)),
        "wo": lin(ks[3], d_model, (d_model, d_model)),
        "w1": lin(ks[4], d_model, (d_model, d_fnn)),
        "w2": lin(ks[5], d_fnn, (d_fnn, d_model)),
    }


if __name__ == "__main__":
    B, T, d_model, d_fnn, num_heads = 2, 8, 32, 64, 4
    key = jax.random.PRNGKey(0)
    kx, kp = jax.random.split(key)
    x = jax.random.normal(kx, (B, T, d_model), jnp.float32)
    params = init_params(kp, d_model, d_fnn)

    ref = reference_block(x, params, num_heads)

    # exactness check: f32 compute path
    out_f32 = jax.block_until_ready(
        transformer_block(x, params, num_heads, compute_dtype=jnp.float32))
    assert out_f32.shape == (B, T, d_model)
    assert jnp.allclose(out_f32, ref, atol=1e-3, rtol=1e-3), \
        f"f32 max abs err {float(jnp.max(jnp.abs(out_f32 - ref)))}"

    # fast path: bf16 matmul operands with f32 accumulation (looser tolerance)
    out_bf16 = jax.block_until_ready(
        transformer_block(x, params, num_heads, compute_dtype=jnp.bfloat16))
    assert out_bf16.shape == (B, T, d_model)
    assert jnp.allclose(out_bf16, ref, atol=1e-1, rtol=1e-1), \
        f"bf16 max abs err {float(jnp.max(jnp.abs(out_bf16 - ref)))}"

    print("KERNEL_OK")
</pallas_src>

<mosaic_0001>
module attributes {stable_mosaic.version = 11 : i64} {
  func.func @_qkv_kernel(%arg0: i32, %arg1: i32, %arg2: i32, %arg3: memref<1x8x32xf32, #tpu.memory_space<vmem>>, %arg4: memref<1x32xf32, #tpu.memory_space<vmem>>, %arg5: memref<1x32x8xf32, #tpu.memory_space<vmem>>, %arg6: memref<1x32x8xf32, #tpu.memory_space<vmem>>, %arg7: memref<1x32x8xf32, #tpu.memory_space<vmem>>, %arg8: memref<1x1x8x8xf32, #tpu.memory_space<vmem>>, %arg9: memref<1x1x8x8xf32, #tpu.memory_space<vmem>>, %arg10: memref<1x1x8x8xf32, #tpu.memory_space<vmem>>, %arg11: memref<8x32xf32, #tpu.memory_space<vmem>>) attributes {dimension_semantics = [#tpu.dimension_semantics<parallel>, #tpu.dimension_semantics<parallel>, #tpu.dimension_semantics<arbitrary>], iteration_bounds = array<i64: 2, 1, 4>, scalar_prefetch = 0 : i64, scratch_operands = 1 : i64, tpu.core_type = #tpu.core_type<tc>, window_params = [{transform_indices = @transform_0, window_bounds = array<i64: 1, 8, 32>}, {pipeline_mode = #tpu.pipeline_mode<synchronous>, transform_indices = @transform_1, window_bounds = array<i64: 1, 32>}, {transform_indices = @transform_2, window_bounds = array<i64: 1, 32, 8>}, {transform_indices = @transform_3, window_bounds = array<i64: 1, 32, 8>}, {transform_indices = @transform_4, window_bounds = array<i64: 1, 32, 8>}, {transform_indices = @transform_5, window_bounds = array<i64: 1, 1, 8, 8>}, {transform_indices = @transform_6, window_bounds = array<i64: 1, 1, 8, 8>}, {transform_indices = @transform_7, window_bounds = array<i64: 1, 1, 8, 8>}]} {
    %c0_i32 = arith.constant 0 : i32
    %0 = arith.cmpi eq, %arg2, %c0_i32 : i32
    %1 = arith.extui %0 : i1 to i32
    %c0_i32_0 = arith.constant 0 : i32
    %2 = arith.cmpi ne, %1, %c0_i32_0 : i32
    scf.if %2 {
      %c0_25 = arith.constant 0 : index
      %c0_26 = arith.constant 0 : index
      %c0_27 = arith.constant 0 : index
      %22 = vector.load %arg3[%c0_25, %c0_26, %c0_27] : memref<1x8x32xf32, #tpu.memory_space<vmem>>, vector<1x8x32xf32>
      %23 = vector.shape_cast %22 : vector<1x8x32xf32> to vector<8x32xf32>
      %c0_28 = arith.constant 0 : index
      %c0_29 = arith.constant 0 : index
      %24 = vector.load %arg4[%c0_28, %c0_29] : memref<1x32xf32, #tpu.memory_space<vmem>>, vector<1x32xf32>
      %25 = vector.shape_cast %24 : vector<1x32xf32> to vector<32xf32>
      %26 = arith.mulf %23, %23 : vector<8x32xf32>
      %cst_30 = arith.constant dense<0.000000e+00> : vector<8xf32>
      %27 = vector.multi_reduction <add>, %26, %cst_30 [1] : vector<8x32xf32> to vector<8xf32>
      %28 = vector.shape_cast %27 : vector<8xf32> to vector<8x1xf32>
      %cst_31 = arith.constant 3.200000e+01 : f32
      %29 = vector.broadcast %cst_31 : f32 to vector<8x1xf32>
      %30 = arith.divf %28, %29 : vector<8x1xf32>
      %cst_32 = arith.constant 9.99999974E-6 : f32
      %31 = vector.broadcast %cst_32 : f32 to vector<8x1xf32>
      %32 = arith.addf %30, %31 : vector<8x1xf32>
      %33 = math.sqrt %32 : vector<8x1xf32>
      %34 = vector.broadcast %33 : vector<8x1xf32> to vector<8x32xf32>
      %35 = arith.divf %23, %34 : vector<8x32xf32>
      %36 = vector.shape_cast %25 : vector<32xf32> to vector<1x32xf32>
      %37 = vector.broadcast %36 : vector<1x32xf32> to vector<8x32xf32>
      %38 = arith.mulf %35, %37 : vector<8x32xf32>
      %c0_33 = arith.constant 0 : index
      %c0_34 = arith.constant 0 : index
      %39 = vector.load %arg11[%c0_33, %c0_34] : memref<8x32xf32, #tpu.memory_space<vmem>>, vector<8x32xf32>
      tpu.vector_store %arg11[%c0_33, %c0_34], %38 {strides = array<i32>} : memref<8x32xf32, #tpu.memory_space<vmem>>, vector<8x32xf32>,
    } else {
    }
    %c0 = arith.constant 0 : index
    %c0_1 = arith.constant 0 : index
    %3 = vector.load %arg11[%c0, %c0_1] : memref<8x32xf32, #tpu.memory_space<vmem>>, vector<8x32xf32>
    %c0_2 = arith.constant 0 : index
    %c0_3 = arith.constant 0 : index
    %c0_4 = arith.constant 0 : index
    %4 = vector.load %arg5[%c0_2, %c0_3, %c0_4] : memref<1x32x8xf32, #tpu.memory_space<vmem>>, vector<1x32x8xf32>
    %5 = vector.shape_cast %4 : vector<1x32x8xf32> to vector<32x8xf32>
    %cst = arith.constant dense<0.000000e+00> : vector<8x8xf32>
    %6 = tpu.matmul %3, %5, %cst {dimension_numbers = #tpu.dot_dimension_numbers<[1], [0], [0], [1], [0, 0, 1, 1], [], []>} : vector<8x32xf32>, vector<32x8xf32>, vector<8x8xf32> -> vector<8x8xf32>
    %c0_5 = arith.constant 0 : index
    %c0_6 = arith.constant 0 : index
    %c0_7 = arith.constant 0 : index
    %c0_8 = arith.constant 0 : index
    %7 = vector.load %arg8[%c0_5, %c0_6, %c0_7, %c0_8] : memref<1x1x8x8xf32, #tpu.memory_space<vmem>>, vector<1x1x8x8xf32>
    %8 = vector.shape_cast %7 : vector<1x1x8x8xf32> to vector<8x8xf32>
    %9 = vector.shape_cast %6 : vector<8x8xf32> to vector<1x1x8x8xf32>
    tpu.vector_store %arg8[%c0_5, %c0_6, %c0_7, %c0_8], %9 {strides = array<i32>} : memref<1x1x8x8xf32, #tpu.memory_space<vmem>>, vector<1x1x8x8xf32>,
    %c0_9 = arith.constant 0 : index
    %c0_10 = arith.constant 0 : index
    %c0_11 = arith.constant 0 : index
    %10 = vector.load %arg6[%c0_9, %c0_10, %c0_11] : memref<1x32x8xf32, #tpu.memory_space<vmem>>, vector<1x32x8xf32>
    %11 = vector.shape_cast %10 : vector<1x32x8xf32> to vector<32x8xf32>
    %cst_12 = arith.constant dense<0.000000e+00> : vector<8x8xf32>
    %12 = tpu.matmul %3, %11, %cst_12 {dimension_numbers = #tpu.dot_dimension_numbers<[1], [0], [0], [1], [0, 0, 1, 1], [], []>} : vector<8x32xf32>, vector<32x8xf32>, vector<8x8xf32> -> vector<8x8xf32>
    %c0_13 = arith.constant 0 : index
    %c0_14 = arith.constant 0 : index
    %c0_15 = arith.constant 0 : index
    %c0_16 = arith.constant 0 : index
    %13 = vector.load %arg9[%c0_13, %c0_14, %c0_15, %c0_16] : memref<1x1x8x8xf32, #tpu.memory_space<vmem>>, vector<1x1x8x8xf32>
    %14 = vector.shape_cast %13 : vector<1x1x8x8xf32> to vector<8x8xf32>
    %15 = vector.shape_cast %12 : vector<8x8xf32> to vector<1x1x8x8xf32>
    tpu.vector_store %arg9[%c0_13, %c0_14, %c0_15, %c0_16], %15 {strides = array<i32>} : memref<1x1x8x8xf32, #tpu.memory_space<vmem>>, vector<1x1x8x8xf32>,
    %c0_17 = arith.constant 0 : index
    %c0_18 = arith.constant 0 : index
    %c0_19 = arith.constant 0 : index
    %16 = vector.load %arg7[%c0_17, %c0_18, %c0_19] : memref<1x32x8xf32, #tpu.memory_space<vmem>>, vector<1x32x8xf32>
    %17 = vector.shape_cast %16 : vector<1x32x8xf32> to vector<32x8xf32>
    %cst_20 = arith.constant dense<0.000000e+00> : vector<8x8xf32>
    %18 = tpu.matmul %3, %17, %cst_20 {dimension_numbers = #tpu.dot_dimension_numbers<[1], [0], [0], [1], [0, 0, 1, 1], [], []>} : vector<8x32xf32>, vector<32x8xf32>, vector<8x8xf32> -> vector<8x8xf32>
    %c0_21 = arith.constant 0 : index
    %c0_22 = arith.constant 0 : index
    %c0_23 = arith.constant 0 : index
    %c0_24 = arith.constant 0 : index
    %19 = vector.load %arg10[%c0_21, %c0_22, %c0_23, %c0_24] : memref<1x1x8x8xf32, #tpu.memory_space<vmem>>, vector<1x1x8x8xf32>
    %20 = vector.shape_cast %19 : vector<1x1x8x8xf32> to vector<8x8xf32>
    %21 = vector.shape_cast %18 : vector<8x8xf32> to vector<1x1x8x8xf32>
    tpu.vector_store %arg10[%c0_21, %c0_22, %c0_23, %c0_24], %21 {strides = array<i32>} : memref<1x1x8x8xf32, #tpu.memory_space<vmem>>, vector<1x1x8x8xf32>,
    return
  }
  func.func @transform_0(%arg0: i32, %arg1: i32, %arg2: i32) -> (i32, i32, i32) {
    %c0_i32 = arith.constant 0 : i32
    %c0_i32_0 = arith.constant 0 : i32
    return %arg0, %arg1, %c0_i32 : i32, i32, i32
  }
  func.func @transform_1(%arg0: i32, %arg1: i32, %arg2: i32) -> (i32, i32) {
    %c0_i32 = arith.constant 0 : i32
    %c0_i32_0 = arith.constant 0 : i32
    %c0_i32_1 = arith.constant 0 : i32
    return %c0_i32, %c0_i32_0 : i32, i32
  }
  func.func @transform_2(%arg0: i32, %arg1: i32, %arg2: i32) -> (i32, i32, i32) {
    %c0_i32 = arith.constant 0 : i32
    %c0_i32_0 = arith.constant 0 : i32
    %c0_i32_1 = arith.constant 0 : i32
    return %arg2, %c0_i32, %c0_i32_0 : i32, i32, i32
  }
  func.func @transform_3(%arg0: i32, %arg1: i32, %arg2: i32) -> (i32, i32, i32) {
    %c0_i32 = arith.constant 0 : i32
    %c0_i32_0 = arith.constant 0 : i32
    %c0_i32_1 = arith.constant 0 : i32
    return %arg2, %c0_i32, %c0_i32_0 : i32, i32, i32
  }
  func.func @transform_4(%arg0: i32, %arg1: i32, %arg2: i32) -> (i32, i32, i32) {
    %c0_i32 = arith.constant 0 : i32
    %c0_i32_0 = arith.constant 0 : i32
    %c0_i32_1 = arith.constant 0 : i32
    return %arg2, %c0_i32, %c0_i32_0 : i32, i32, i32
  }
  func.func @transform_5(%arg0: i32, %arg1: i32, %arg2: i32) -> (i32, i32, i32, i32) {
    %c0_i32 = arith.constant 0 : i32
    %c0_i32_0 = arith.constant 0 : i32
    return %arg0, %arg2, %arg1, %c0_i32 : i32, i32, i32, i32
  }
  func.func @transform_6(%arg0: i32, %arg1: i32, %arg2: i32) -> (i32, i32, i32, i32) {
    %c0_i32 = arith.constant 0 : i32
    %c0_i32_0 = arith.constant 0 : i32
    return %arg0, %arg2, %arg1, %c0_i32 : i32, i32, i32, i32
  }
  func.func @transform_7(%arg0: i32, %arg1: i32, %arg2: i32) -> (i32, i32, i32, i32) {
    %c0_i32 = arith.constant 0 : i32
    %c0_i32_0 = arith.constant 0 : i32
    return %arg0, %arg2, %arg1, %c0_i32 : i32, i32, i32, i32
  }
}

</mosaic_0001>

<llo_original>
// kernel: tpu_custom_call.1
$region0: #{tpu_custom_call.1}
  #allocation0 [shape = 'u32[]', space=smem, size = 0x4, offset = 0x4, fixed_abs, tag = 'smem constant byte address 0x4 - core index']
  #allocation1 [shape = 'u32[144,128]{1,0:T(1,128)}', space=vmem, size = 0x12000, scoped, tag = 'internal scratch']
  #allocation2 [shape = 'f32[8,32]{1,0:T(8,128)}', space=vmem, size = 0x1000, scoped, tag = 'scratch operand']
  %s0 = inlined_call_operand.vmem [shape: f32[2,8,32], index: 0, kind: input, shape index: {}]
  %s1 = inlined_call_operand.vmem [shape: f32[1,32], index: 1, kind: input, shape index: {}]
  %s2 = inlined_call_operand.vmem [shape: f32[4,32,8], index: 2, kind: input, shape index: {}]
  %s3 = inlined_call_operand.vmem [shape: f32[4,32,8], index: 3, kind: input, shape index: {}]
  %s4 = inlined_call_operand.vmem [shape: f32[4,32,8], index: 4, kind: input, shape index: {}]
  %s5 = inlined_call_operand.hbm [shape: f32[2,4,8,8], index: 5, kind: output, shape index: {0}]
  %s6 = inlined_call_operand.hbm [shape: f32[2,4,8,8], index: 6, kind: output, shape index: {1}]
  %s7 = inlined_call_operand.hbm [shape: f32[2,4,8,8], index: 7, kind: output, shape index: {2}]
  %8 = xla_tuple %s5, %s6, %s7
  %s9 = sld [smem:[#allocation0]]
  $region73: #{tpu_custom_call.1} parent=0
    _
  %s11 = ssub.s32 1, %s9
  %s12 = scalar_select 0, %s11, %s9
  $region1: #{tpu_custom_call.1} parent=0
    #allocation3 [shape = 'u8[8192]{0}', space=vmem, size = 0x2000, scoped, tag = 'output window, operand 0']
    #allocation4 [shape = 's32[2]{0}', space=sflag, size = 0x8, scoped, tag = 'scoped memory for tpu_custom_call.1']
    #allocation5 [shape = 'u8[8192]{0}', space=vmem, size = 0x2000, scoped, tag = 'output window, operand 1']
    #allocation6 [shape = 's32[2]{0}', space=sflag, size = 0x8, scoped, tag = 'scoped memory for tpu_custom_call.1']
    #allocation7 [shape = 'u8[8192]{0}', space=vmem, size = 0x2000, scoped, tag = 'output window, operand 2']
    %13 = vsyncpa [#allocation4], 0
    %s14 = scalar_lea.sflag [#allocation4], 1
    %15 = vsyncpa %s14, 0
    %16 = vsyncpa [#allocation6], 0
    %s17 = scalar_lea.sflag [#allocation6], 1
    %18 = vsyncpa %s17, 0
    loop: start=0, step=1, limit=10
    $region2: #{tpu_custom_call.1} parent=1 // loop_pre_header
      _
    $region3: #{tpu_custom_call.1} parent=1 // loop_header
      %s20 = sphi 0, %s24
      %p21 = scmp.ge.s32.totalorder %s20, 10
      %s27 = sphi 0, %s46
      %s28 = sphi 0, %s42
      %s29 = sphi 0, %s38
      %s30 = sphi 0, %s27
      %s31 = sphi 0, %s28
      %s32 = sphi 0, %s29
      %s33 = sphi 0, %s30
      %s34 = sphi 0, %s31
      %s35 = sphi 0, %s32
      %s51 = sphi 0, %s53
      %s54 = sphi 0, %s51
      %s55 = sphi 0, %s54
      %s71 = sphi 0, %s55
      %s75 = sphi 0, %s75
      %s77 = sphi 0, %s75
      %s78 = sphi 0, %s77
      %s92 = sphi 0, %s78
      %s98 = sphi 0, %s100
      %s101 = sphi 0, %s98
      %s102 = sphi 0, %s101
      %s118 = sphi 0, %s102
      %s124 = sphi 0, %s126
      %s127 = sphi 0, %s124
      %s128 = sphi 0, %s127
      %s144 = sphi 0, %s128
      %s150 = sphi 0, %s152
      %s153 = sphi 0, %s150
      %s154 = sphi 0, %s153
      %s170 = sphi 0, %s154
      %s180 = sphi 0, %s182
      %s183 = sphi 0, %s180
      %s184 = sphi 0, %s183
      %s200 = sphi 0, %s184
      %s210 = sphi 0, %s212
      %s213 = sphi 0, %s210
      %s214 = sphi 0, %s213
      %s230 = sphi 0, %s214
      %s240 = sphi 0, %s242
      %s243 = sphi 0, %s240
      %s244 = sphi 0, %s243
      %s260 = sphi 0, %s244
    $region4: #{tpu_custom_call.1} parent=1 // loop_header_branch
      %23 = sbr.rel (%p21) target = $region8
    $region5: #{tpu_custom_call.1} parent=1 // loop_body
      %s25 = ssub.s32 %s20, 1
      %s26 = ssub.s32 %s20, 2
      %s36 = sadd.s32 1, %s29
      %p37 = scmp.ge.s32.totalorder %s36, 4
      %s38 = scalar_select %p37, 0, %s36
      %s39 = sadd.s32 1, %s28
      %s40 = scalar_select %p37, %s39, %s28
      %p41 = scmp.ge.s32.totalorder %s40, 1
      %s42 = scalar_select %p41, 0, %s40
      %s43 = sadd.s32 1, %s27
      %s44 = scalar_select %p41, %s43, %s27
      %p45 = scmp.ge.s32.totalorder %s44, 2
      %s46 = scalar_select %p45, 0, %s44
      %s47 = ssub.s32 %s27, %s46
      %s48 = ssub.s32 %s28, %s42
      %s49 = sor.u32 %s47, %s48
      %p50 = scmp.eq.s32.totalorder %s49, 0
      %s52 = sadd.s32 %s51, 1
      %s53 = scalar_select %p50, %s51, %s52
      %p56 = pneg %p50
      %p57 = scmp.eq.s32.totalorder %s20, 7
      %p58 = por %p56, %p57
      %p59 = scmp.ne.s32.totalorder %s51, %s54
      %p60 = scmp.eq.s32.totalorder %s20, 0
      %p61 = por %p59, %p60
      %p62 = scmp.ne.s32.totalorder %s51, %s54
      %p63 = scmp.eq.s32.totalorder %s25, 7
      %p64 = por %p62, %p63
      %p65 = scmp.ne.s32.totalorder %s54, %s55
      %p66 = scmp.eq.s32.totalorder %s25, 0
      %p67 = por %p65, %p66
      %p68 = scmp.ne.s32.totalorder %s54, %s55
      %p69 = scmp.eq.s32.totalorder %s26, 7
      %p70 = por %p68, %p69
      %p72 = scmp.ne.s32.totalorder %s55, %s71
      %p73 = scmp.eq.s32.totalorder %s26, 0
      %p74 = por %p72, %p73
      %s76 = sadd.s32 %s75, 1
      %p79 = scmp.eq.s32.totalorder %s20, 7
      %p80 = scmp.ne.s32.totalorder %s75, %s77
      %p81 = scmp.eq.s32.totalorder %s20, 0
      %p82 = por %p80, %p81
      %p83 = scmp.ne.s32.totalorder %s75, %s77
      %p84 = scmp.eq.s32.totalorder %s25, 7
      %p85 = por %p83, %p84
      %p86 = scmp.ne.s32.totalorder %s77, %s78
      %p87 = scmp.eq.s32.totalorder %s25, 0
      %p88 = por %p86, %p87
      %p89 = scmp.ne.s32.totalorder %s77, %s78
      %p90 = scmp.eq.s32.totalorder %s26, 7
      %p91 = por %p89, %p90
      %p93 = scmp.ne.s32.totalorder %s78, %s92
      %p94 = scmp.eq.s32.totalorder %s26, 0
      %p95 = por %p93, %p94
      %s96 = ssub.s32 %s29, %s38
      %p97 = scmp.eq.s32.totalorder %s96, 0
      %s99 = sadd.s32 %s98, 1
      %s100 = scalar_select %p97, %s98, %s99
      %p103 = pneg %p97
      %p104 = scmp.eq.s32.totalorder %s20, 7
      %p105 = por %p103, %p104
      %p106 = scmp.ne.s32.totalorder %s98, %s101
      %p107 = scmp.eq.s32.totalorder %s20, 0
      %p108 = por %p106, %p107
      %p109 = scmp.ne.s32.totalorder %s98, %s101
      %p110 = scmp.eq.s32.totalorder %s25, 7
      %p111 = por %p109, %p110
      %p112 = scmp.ne.s32.totalorder %s101, %s102
      %p113 = scmp.eq.s32.totalorder %s25, 0
      %p114 = por %p112, %p113
      %p115 = scmp.ne.s32.totalorder %s101, %s102
      %p116 = scmp.eq.s32.totalorder %s26, 7
      %p117 = por %p115, %p116
      %p119 = scmp.ne.s32.totalorder %s102, %s118
      %p120 = scmp.eq.s32.totalorder %s26, 0
      %p121 = por %p119, %p120
      %s122 = ssub.s32 %s29, %s38
      %p123 = scmp.eq.s32.totalorder %s122, 0
      %s125 = sadd.s32 %s124, 1
      %s126 = scalar_select %p123, %s124, %s125
      %p129 = pneg %p123
      %p130 = scmp.eq.s32.totalorder %s20, 7
      %p131 = por %p129, %p130
      %p132 = scmp.ne.s32.totalorder %s124, %s127
      %p133 = scmp.eq.s32.totalorder %s20, 0
      %p134 = por %p132, %p133
      %p135 = scmp.ne.s32.totalorder %s124, %s127
      %p136 = scmp.eq.s32.totalorder %s25, 7
      %p137 = por %p135, %p136
      %p138 = scmp.ne.s32.totalorder %s127, %s128
      %p139 = scmp.eq.s32.totalorder %s25, 0
      %p140 = por %p138, %p139
      %p141 = scmp.ne.s32.totalorder %s127, %s128
      %p142 = scmp.eq.s32.totalorder %s26, 7
      %p143 = por %p141, %p142
      %p145 = scmp.ne.s32.totalorder %s128, %s144
      %p146 = scmp.eq.s32.totalorder %s26, 0
      %p147 = por %p145, %p146
      %s148 = ssub.s32 %s29, %s38
      %p149 = scmp.eq.s32.totalorder %s148, 0
      %s151 = sadd.s32 %s150, 1
      %s152 = scalar_select %p149, %s150, %s151
      %p155 = pneg %p149
      %p156 = scmp.eq.s32.totalorder %s20, 7
      %p157 = por %p155, %p156
      %p158 = scmp.ne.s32.totalorder %s150, %s153
      %p159 = scmp.eq.s32.totalorder %s20, 0
      %p160 = por %p158, %p159
      %p161 = scmp.ne.s32.totalorder %s150, %s153
      %p162 = scmp.eq.s32.totalorder %s25, 7
      %p163 = por %p161, %p162
      %p164 = scmp.ne.s32.totalorder %s153, %s154
      %p165 = scmp.eq.s32.totalorder %s25, 0
      %p166 = por %p164, %p165
      %p167 = scmp.ne.s32.totalorder %s153, %s154
      %p168 = scmp.eq.s32.totalorder %s26, 7
      %p169 = por %p167, %p168
      %p171 = scmp.ne.s32.totalorder %s154, %s170
      %p172 = scmp.eq.s32.totalorder %s26, 0
      %p173 = por %p171, %p172
      %s174 = ssub.s32 %s27, %s46
      %s175 = ssub.s32 %s29, %s38
      %s176 = sor.u32 %s174, %s175
      %s177 = ssub.s32 %s28, %s42
      %s178 = sor.u32 %s176, %s177
      %p179 = scmp.eq.s32.totalorder %s178, 0
      %s181 = sadd.s32 %s180, 1
      %s182 = scalar_select %p179, %s180, %s181
      %p185 = pneg %p179
      %p186 = scmp.eq.s32.totalorder %s20, 7
      %p187 = por %p185, %p186
      %p188 = scmp.ne.s32.totalorder %s180, %s183
      %p189 = scmp.eq.s32.totalorder %s20, 0
      %p190 = por %p188, %p189
      %p191 = scmp.ne.s32.totalorder %s180, %s183
      %p192 = scmp.eq.s32.totalorder %s25, 7
      %p193 = por %p191, %p192
      %p194 = scmp.ne.s32.totalorder %s183, %s184
      %p195 = scmp.eq.s32.totalorder %s25, 0
      %p196 = por %p194, %p195
      %p197 = scmp.ne.s32.totalorder %s183, %s184
      %p198 = scmp.eq.s32.totalorder %s26, 7
      %p199 = por %p197, %p198
      %p201 = scmp.ne.s32.totalorder %s184, %s200
      %p202 = scmp.eq.s32.totalorder %s26, 0
      %p203 = por %p201, %p202
      %s204 = ssub.s32 %s27, %s46
      %s205 = ssub.s32 %s29, %s38
      %s206 = sor.u32 %s204, %s205
      %s207 = ssub.s32 %s28, %s42
      %s208 = sor.u32 %s206, %s207
      %p209 = scmp.eq.s32.totalorder %s208, 0
      %s211 = sadd.s32 %s210, 1
      %s212 = scalar_select %p209, %s210, %s211
      %p215 = pneg %p209
      %p216 = scmp.eq.s32.totalorder %s20, 7
      %p217 = por %p215, %p216
      %p218 = scmp.ne.s32.totalorder %s210, %s213
      %p219 = scmp.eq.s32.totalorder %s20, 0
      %p220 = por %p218, %p219
      %p221 = scmp.ne.s32.totalorder %s210, %s213
      %p222 = scmp.eq.s32.totalorder %s25, 7
      %p223 = por %p221, %p222
      %p224 = scmp.ne.s32.totalorder %s213, %s214
      %p225 = scmp.eq.s32.totalorder %s25, 0
      %p226 = por %p224, %p225
      %p227 = scmp.ne.s32.totalorder %s213, %s214
      %p228 = scmp.eq.s32.totalorder %s26, 7
      %p229 = por %p227, %p228
      %p231 = scmp.ne.s32.totalorder %s214, %s230
      %p232 = scmp.eq.s32.totalorder %s26, 0
      %p233 = por %p231, %p232
      %s234 = ssub.s32 %s27, %s46
      %s235 = ssub.s32 %s29, %s38
      %s236 = sor.u32 %s234, %s235
      %s237 = ssub.s32 %s28, %s42
      %s238 = sor.u32 %s236, %s237
      %p239 = scmp.eq.s32.totalorder %s238, 0
      %s241 = sadd.s32 %s240, 1
      %s242 = scalar_select %p239, %s240, %s241
      %p245 = pneg %p239
      %p246 = scmp.eq.s32.totalorder %s20, 7
      %p247 = por %p245, %p246
      %p248 = scmp.ne.s32.totalorder %s240, %s243
      %p249 = scmp.eq.s32.totalorder %s20, 0
      %p250 = por %p248, %p249
      %p251 = scmp.ne.s32.totalorder %s240, %s243
      %p252 = scmp.eq.s32.totalorder %s25, 7
      %p253 = por %p251, %p252
      %p254 = scmp.ne.s32.totalorder %s243, %s244
      %p255 = scmp.eq.s32.totalorder %s25, 0
      %p256 = por %p254, %p255
      %p257 = scmp.ne.s32.totalorder %s243, %s244
      %p258 = scmp.eq.s32.totalorder %s26, 7
      %p259 = por %p257, %p258
      %p261 = scmp.ne.s32.totalorder %s244, %s260
      %p262 = scmp.eq.s32.totalorder %s26, 0
      %p263 = por %p261, %p262
      %p264 = scmp.le.s32.totalorder 1, %s20
      %p265 = scmp.lt.s32.totalorder %s20, 9
      %p266 = pnand %p264, %p265
      %p267 = pneg %p266
      // Predicated region
      $region9: #{tpu_custom_call.1} parent=5 // pred_check
        _
      $region10: #{tpu_custom_call.1} parent=5 // pred_check_branch
        %269 = sbr.rel (%p266) target = $region12
      $region11: #{tpu_custom_call.1} parent=5 // pred_region
        %s270 = ssub.s32 %s20, 1
        // Predicated region
        $region13: #{tpu_custom_call.1} parent=11 // pred_check
          %p271 = pneg %p88
        $region14: #{tpu_custom_call.1} parent=11 // pred_check_branch
          %273 = sbr.rel (%p271) target = $region16
        $region15: #{tpu_custom_call.1} parent=11 // pred_region
          _
        $region16: #{tpu_custom_call.1} parent=11 // pred_fallthru
          _
      $region12: #{tpu_custom_call.1} parent=5 // pred_fallthru
        _
      %p274 = scmp.lt.s32.totalorder %s20, 8
      // Predicated region
      $region17: #{tpu_custom_call.1} parent=5 // pred_check
        %p275 = pneg %p274
      $region18: #{tpu_custom_call.1} parent=5 // pred_check_branch
        %277 = sbr.rel (%p275) target = $region20
      $region19: #{tpu_custom_call.1} parent=5 // pred_region
        // Predicated region
        $region21: #{tpu_custom_call.1} parent=19 // pred_check
          %p278 = pneg %p61
        $region22: #{tpu_custom_call.1} parent=19 // pred_check_branch
          %280 = sbr.rel (%p278) target = $region24
        $region23: #{tpu_custom_call.1} parent=19 // pred_region
          %p281 = scmp.lt.s32.totalorder %s27, 1
          %s282 = scalar_select %p281, %s27, 1
          %p283 = scmp.lt.s32.totalorder %s28, 0
          %s284 = scalar_select %p283, %s28, 0
          %s285 = sadd.s32 %s284, %s282
          %s286 = smul.addr %s285, 8
          %s287 = scalar_lea.vmem %s0, %s286
        $region24: #{tpu_custom_call.1} parent=19 // pred_fallthru
          _
        // Predicated region
        $region25: #{tpu_custom_call.1} parent=19 // pred_check
          %p288 = pneg %p108
        $region26: #{tpu_custom_call.1} parent=19 // pred_check_branch
          %290 = sbr.rel (%p288) target = $region28
        $region27: #{tpu_custom_call.1} parent=19 // pred_region
          %p291 = scmp.lt.s32.totalorder %s29, 3
          %s292 = scalar_select %p291, %s29, 3
          %s293 = smul.addr %s292, 4
          %s294 = smul.addr %s293, 8
          %s295 = scalar_lea.vmem %s2, %s294
        $region28: #{tpu_custom_call.1} parent=19 // pred_fallthru
          _
        // Predicated region
        $region29: #{tpu_custom_call.1} parent=19 // pred_check
          %p296 = pneg %p134
        $region30: #{tpu_custom_call.1} parent=19 // pred_check_branch
          %298 = sbr.rel (%p296) target = $region32
        $region31: #{tpu_custom_call.1} parent=19 // pred_region
          %p299 = scmp.lt.s32.totalorder %s29, 3
          %s300 = scalar_select %p299, %s29, 3
          %s301 = smul.addr %s300, 4
          %s302 = smul.addr %s301, 8
          %s303 = scalar_lea.vmem %s3, %s302
        $region32: #{tpu_custom_call.1} parent=19 // pred_fallthru
          _
        // Predicated region
        $region33: #{tpu_custom_call.1} parent=19 // pred_check
          %p304 = pneg %p160
        $region34: #{tpu_custom_call.1} parent=19 // pred_check_branch
          %306 = sbr.rel (%p304) target = $region36
        $region35: #{tpu_custom_call.1} parent=19 // pred_region
          %p307 = scmp.lt.s32.totalorder %s29, 3
          %s308 = scalar_select %p307, %s29, 3
          %s309 = smul.addr %s308, 4
          %s310 = smul.addr %s309, 8
          %s311 = scalar_lea.vmem %s4, %s310
        $region36: #{tpu_custom_call.1} parent=19 // pred_fallthru
          _
      $region20: #{tpu_custom_call.1} parent=5 // pred_fallthru
        _
      %p312 = scmp.le.s32.totalorder 1, %s20
      %p313 = scmp.lt.s32.totalorder %s20, 9
      %p314 = pnand %p312, %p313
      %p315 = pneg %p314
      // Predicated region
      $region37: #{tpu_custom_call.1} parent=5 // pred_check
        _
      $region38: #{tpu_custom_call.1} parent=5 // pred_check_branch
        %317 = sbr.rel (%p314) target = $region40
      $region39: #{tpu_custom_call.1} parent=5 // pred_region
        %s318 = ssub.s32 %s20, 1
        %p319 = scmp.lt.s32.totalorder %s30, 1
        %s320 = scalar_select %p319, %s30, 1
        %p321 = scmp.lt.s32.totalorder %s31, 0
        %s322 = scalar_select %p321, %s31, 0
        %s323 = sadd.s32 %s322, %s320
        %s324 = smul.addr %s323, 8
        %s325 = scalar_lea.vmem %s0, %s324
        %p326 = pneg %p67
        %p327 = pneg %p64
        %p328 = pneg %p88
        %p329 = pneg %p85
        %p330 = scmp.lt.s32.totalorder %s32, 3
        %s331 = scalar_select %p330, %s32, 3
        %s332 = smul.addr %s331, 4
        %s333 = smul.addr %s332, 8
        %s334 = scalar_lea.vmem %s2, %s333
        %p335 = pneg %p114
        %p336 = pneg %p111
        %p337 = scmp.lt.s32.totalorder %s32, 3
        %s338 = scalar_select %p337, %s32, 3
        %s339 = smul.addr %s338, 4
        %s340 = smul.addr %s339, 8
        %s341 = scalar_lea.vmem %s3, %s340
        %p342 = pneg %p140
        %p343 = pneg %p137
        %p344 = scmp.lt.s32.totalorder %s32, 3
        %s345 = scalar_select %p344, %s32, 3
        %s346 = smul.addr %s345, 4
        %s347 = smul.addr %s346, 8
        %s348 = scalar_lea.vmem %s4, %s347
        %p349 = pneg %p166
        %p350 = pneg %p163
        %p351 = pneg %p196
        %p352 = pneg %p193
        %s353 = sand.u32 %s183, 1
        %s354 = scalar_lea.sflag [#allocation4], %s353
        %s355 = sand.u32 %s183, 1
        %s356 = smul.addr %s355, 8
        %s357 = scalar_lea.vmem [#allocation3], %s356
        %p358 = pneg %p226
        %p359 = pneg %p223
        %s360 = sand.u32 %s25, 1
        %s361 = scalar_lea.sflag [#allocation6], %s360
        %s362 = sand.u32 %s213, 1
        %s363 = smul.addr %s362, 8
        %s364 = scalar_lea.vmem [#allocation5], %s363
        %p365 = pneg %p256
        %p366 = pneg %p253
        %s367 = sand.u32 %s25, 1
        %s368 = scalar_lea.sflag [#allocation6], %s367
        %s369 = sand.u32 %s243, 1
        %s370 = smul.addr %s369, 8
        %s371 = scalar_lea.vmem [#allocation7], %s370
        %p372 = scmp.lt.s32.totalorder %s30, 1
        %s373 = scalar_select %p372, %s30, 1
        %p374 = scmp.lt.s32.totalorder %s31, 0
        %s375 = scalar_select %p374, %s31, 0
        %s376 = sadd.s32 %s375, %s373
        %s377 = smul.addr %s376, 8
        %s378 = scalar_lea.vmem %s0, %s377
        %p379 = scmp.lt.s32.totalorder %s32, 3
        %s380 = scalar_select %p379, %s32, 3
        %s381 = smul.addr %s380, 4
        %s382 = smul.addr %s381, 8
        %s383 = scalar_lea.vmem %s2, %s382
        %p384 = scmp.lt.s32.totalorder %s32, 3
        %s385 = scalar_select %p384, %s32, 3
        %s386 = smul.addr %s385, 4
        %s387 = smul.addr %s386, 8
        %s388 = scalar_lea.vmem %s3, %s387
        %p389 = scmp.lt.s32.totalorder %s32, 3
        %s390 = scalar_select %p389, %s32, 3
        %s391 = smul.addr %s390, 4
        %s392 = smul.addr %s391, 8
        %s393 = scalar_lea.vmem %s4, %s392
        %p394 = scmp.eq.s32.totalorder %s32, 0
        // Predicated region
        $region41: #{tpu_custom_call.1} parent=39 // pred_check
          %p395 = pneg %p394
        $region42: #{tpu_custom_call.1} parent=39 // pred_check_branch
          %397 = sbr.rel (%p395) target = $region44
        $region43: #{tpu_custom_call.1} parent=39 // pred_region
          %v398 = vld [vmem:[%s378] sm:$0xff]
          %v399 = vld [vmem:[%s1] sm:$0x1]
          %v400 = vmul.f32 %v398, %v398
          %vm401 = vcmask 261120
          %v402 = vsel %vm401, %v400, 0.0
          %403 = vadd.xlane.f32.xlu0 %v402
          %v404 = vpop.xlane.xlu0 %403
          %v405 = vrcp.pop 32.0
          %v406 = vmul.f32 %v404, %v405
          %v407 = vadd.f32 %v406, 1e-05
          %v408 = vrsqrt.pop %v407
          %v409 = vmul.f32 %v407, %v408
          %vm410 = vcmp.eq.f32.partialorder %v407, inf
          %v411 = vsel %vm410, %v407, %v409
          %vm412 = vcmp.eq.f32.partialorder %v407, 0.0
          %v413 = vand.u32 %v407, 2147483648
          %v414 = vsel %vm412, %v413, %v411
          %v415 = vrcp.pop %v414
          %v416 = vmul.f32 %v398, %v415
          %v418 = vlaneseq
          %v419 = vshrl.u32 %v418, 7
          %v420 = vsub.s32 0, %v419
          %v421 = vrot.slane %v399, %v420
          %v423 = vmul.f32 %v416, %v421
          %424 = vst.msk [vmem:[#allocation2] sm:$0xff] %vm401, %v423
        $region44: #{tpu_custom_call.1} parent=39 // pred_fallthru
          _
        %v425 = vld [vmem:[#allocation2] sm:$0xff]
        %v426 = vld [vmem:[%s383] sm:$0xff]
        %v427 = vld [vmem:[%s383 + $0x8] sm:$0xff]
        %v428 = vld [vmem:[%s383 + $0x10] sm:$0xff]
        %v429 = vld [vmem:[%s383 + $0x18] sm:$0xff]
        %vm430 = vcmask 261120
        %v432 = vsel %vm430, %v425, 0
        %434 = vmatprep.subr.mxu0 0.0
        %435 = vmatpush1.msra.mxu0 %v426
        %436 = vmatprep.subr.mxu0 0.0
        %437 = vmatpush1.msra.mxu0 %v427
        %438 = vmatprep.subr.mxu0 0.0
        %439 = vmatpush1.msra.mxu0 %v428
        %440 = vmatprep.subr.mxu0 0.0
        %441 = vmatpush1.msra.mxu0 %v429
        %442 = vmatprep.subr.mxu0 0.0
        %443 = vmatpush1.msra.mxu0 0.0
        %444 = vmatprep.subr.mxu0 0.0
        %445 = vmatpush1.msra.mxu0 0.0
        %446 = vmatprep.subr.mxu0 0.0
        %447 = vmatpush1.msra.mxu0 0.0
        %448 = vmatprep.subr.mxu0 0.0
        %449 = vmatpush1.msra.mxu0 0.0
        %450 = vmatprep.subr.mxu0 0.0
        %451 = vmatpush1.msra.mxu0 0.0
        %452 = vmatprep.subr.mxu0 0.0
        %453 = vmatpush1.msra.mxu0 0.0
        %454 = vmatprep.subr.mxu0 0.0
        %455 = vmatpush1.msra.mxu0 0.0
        %456 = vmatprep.subr.mxu0 0.0
        %457 = vmatpush1.msra.mxu0 0.0
        %458 = vmatprep.subr.mxu0 0.0
        %459 = vmatpush1.msra.mxu0 0.0
        %460 = vmatprep.subr.mxu0 0.0
        %461 = vmatpush1.msra.mxu0 0.0
        %462 = vmatprep.subr.mxu0 0.0
        %463 = vmatpush1.msra.mxu0 0.0
        %464 = vmatprep.subr.mxu0 0.0
        %465 = vmatpush1.msra.mxu0 0.0
        %466 = vmatprep.subr.mxu0 0.0
        %467 = vmatpush1.msra.mxu0 0.0
        %468 = vmatprep.subr.mxu0 0.0
        %469 = vmatpush1.msra.mxu0 0.0
        %470 = vmatprep.subr.mxu0 0.0
        %471 = vmatpush1.msra.mxu0 0.0
        %472 = vmatprep.subr.mxu0 0.0
        %473 = vmatpush1.msra.mxu0 0.0
        %474 = vmatprep.subr.mxu0 0.0
        %475 = vmatpush1.msra.mxu0 0.0
        %476 = vmatprep.subr.mxu0 0.0
        %477 = vmatpush1.msra.mxu0 0.0
        %478 = vmatprep.subr.mxu0 0.0
        %479 = vmatpush1.msra.mxu0 0.0
        %480 = vmatprep.subr.mxu0 0.0
        %481 = vmatpush1.msra.mxu0 0.0
        %482 = vmatprep.subr.mxu0 0.0
        %483 = vmatpush1.msra.mxu0 0.0
        %484 = vmatprep.subr.mxu0 0.0
        %485 = vmatpush1.msra.mxu0 0.0
        %486 = vmatprep.subr.mxu0 0.0
        %487 = vmatpush1.msra.mxu0 0.0
        %488 = vmatprep.subr.mxu0 0.0
        %489 = vmatpush1.msra.mxu0 0.0
        %490 = vmatprep.subr.mxu0 0.0
        %491 = vmatpush1.msra.mxu0 0.0
        %492 = vmatprep.subr.mxu0 0.0
        %493 = vmatpush1.msra.mxu0 0.0
        %494 = vmatprep.subr.mxu0 0.0
        %495 = vmatpush1.msra.mxu0 0.0
        %496 = vmatprep.subr.mxu0 0.0
        %497 = vmatpush1.msra.mxu0 0.0
        %498 = vmatprep.mubr.f32.mxu0 0.0
        %499 = vmatmul.mubr.f32.gmra.mrb[0].mxu0 %v432
        %v500 = vpop.f32.mrb[0].mxu0
        %v501 = vadd.f32 0.0, %v500
        %v502 = vpop.f32.mrb[0].mxu0
        %503 = vdwg.mxu0
        %vm504 = vcmask 64512
        %505 = vst.msk [vmem:[%s357] sm:$0xff] %vm504, %v501
        %v506 = vld [vmem:[%s388] sm:$0xff]
        %v507 = vld [vmem:[%s388 + $0x8] sm:$0xff]
        %v508 = vld [vmem:[%s388 + $0x10] sm:$0xff]
        %v509 = vld [vmem:[%s388 + $0x18] sm:$0xff]
        %510 = vmatprep.subr.mxu0 0.0
        %511 = vmatpush1.msra.mxu0 %v506
        %512 = vmatprep.subr.mxu0 0.0
        %513 = vmatpush1.msra.mxu0 %v507
        %514 = vmatprep.subr.mxu0 0.0
        %515 = vmatpush1.msra.mxu0 %v508
        %516 = vmatprep.subr.mxu0 0.0
        %517 = vmatpush1.msra.mxu0 %v509
        %518 = vmatprep.subr.mxu0 0.0
        %519 = vmatpush1.msra.mxu0 0.0
        %520 = vmatprep.subr.mxu0 0.0
        %521 = vmatpush1.msra.mxu0 0.0
        %522 = vmatprep.subr.mxu0 0.0
        %523 = vmatpush1.msra.mxu0 0.0
        %524 = vmatprep.subr.mxu0 0.0
        %525 = vmatpush1.msra.mxu0 0.0
        %526 = vmatprep.subr.mxu0 0.0
        %527 = vmatpush1.msra.mxu0 0.0
        %528 = vmatprep.subr.mxu0 0.0
        %529 = vmatpush1.msra.mxu0 0.0
        %530 = vmatprep.subr.mxu0 0.0
        %531 = vmatpush1.msra.mxu0 0.0
        %532 = vmatprep.subr.mxu0 0.0
        %533 = vmatpush1.msra.mxu0 0.0
        %534 = vmatprep.subr.mxu0 0.0
        %535 = vmatpush1.msra.mxu0 0.0
        %536 = vmatprep.subr.mxu0 0.0
        %537 = vmatpush1.msra.mxu0 0.0
        %538 = vmatprep.subr.mxu0 0.0
        %539 = vmatpush1.msra.mxu0 0.0
        %540 = vmatprep.subr.mxu0 0.0
        %541 = vmatpush1.msra.mxu0 0.0
        %542 = vmatprep.subr.mxu0 0.0
        %543 = vmatpush1.msra.mxu0 0.0
        %544 = vmatprep.subr.mxu0 0.0
        %545 = vmatpush1.msra.mxu0 0.0
        %546 = vmatprep.subr.mxu0 0.0
        %547 = vmatpush1.msra.mxu0 0.0
        %548 = vmatprep.subr.mxu0 0.0
        %549 = vmatpush1.msra.mxu0 0.0
        %550 = vmatprep.subr.mxu0 0.0
        %551 = vmatpush1.msra.mxu0 0.0
        %552 = vmatprep.subr.mxu0 0.0
        %553 = vmatpush1.msra.mxu0 0.0
        %554 = vmatprep.subr.mxu0 0.0
        %555 = vmatpush1.msra.mxu0 0.0
        %556 = vmatprep.subr.mxu0 0.0
        %557 = vmatpush1.msra.mxu0 0.0
        %558 = vmatprep.subr.mxu0 0.0
        %559 = vmatpush1.msra.mxu0 0.0
        %560 = vmatprep.subr.mxu0 0.0
        %561 = vmatpush1.msra.mxu0 0.0
        %562 = vmatprep.subr.mxu0 0.0
        %563 = vmatpush1.msra.mxu0 0.0
        %564 = vmatprep.subr.mxu0 0.0
        %565 = vmatpush1.msra.mxu0 0.0
        %566 = vmatprep.subr.mxu0 0.0
        %567 = vmatpush1.msra.mxu0 0.0
        %568 = vmatprep.subr.mxu0 0.0
        %569 = vmatpush1.msra.mxu0 0.0
        %570 = vmatprep.subr.mxu0 0.0
        %571 = vmatpush1.msra.mxu0 0.0
        %572 = vmatprep.subr.mxu0 0.0
        %573 = vmatpush1.msra.mxu0 0.0
        %574 = vmatprep.mubr.f32.mxu0 0.0
        %575 = vmatmul.mubr.f32.gmra.mrb[0].mxu0 %v432
        %v576 = vpop.f32.mrb[0].mxu0
        %v577 = vadd.f32 0.0, %v576
        %v578 = vpop.f32.mrb[0].mxu0
        %579 = vdwg.mxu0
        %580 = vst.msk [vmem:[%s364] sm:$0xff] %vm504, %v577
        %v581 = vld [vmem:[%s393] sm:$0xff]
        %v582 = vld [vmem:[%s393 + $0x8] sm:$0xff]
        %v583 = vld [vmem:[%s393 + $0x10] sm:$0xff]
        %v584 = vld [vmem:[%s393 + $0x18] sm:$0xff]
        %585 = vmatprep.subr.mxu0 0.0
        %586 = vmatpush1.msra.mxu0 %v581
        %587 = vmatprep.subr.mxu0 0.0
        %588 = vmatpush1.msra.mxu0 %v582
        %589 = vmatprep.subr.mxu0 0.0
        %590 = vmatpush1.msra.mxu0 %v583
        %591 = vmatprep.subr.mxu0 0.0
        %592 = vmatpush1.msra.mxu0 %v584
        %593 = vmatprep.subr.mxu0 0.0
        %594 = vmatpush1.msra.mxu0 0.0
        %595 = vmatprep.subr.mxu0 0.0
        %596 = vmatpush1.msra.mxu0 0.0
        %597 = vmatprep.subr.mxu0 0.0
        %598 = vmatpush1.msra.mxu0 0.0
        %599 = vmatprep.subr.mxu0 0.0
        %600 = vmatpush1.msra.mxu0 0.0
        %601 = vmatprep.subr.mxu0 0.0
        %602 = vmatpush1.msra.mxu0 0.0
        %603 = vmatprep.subr.mxu0 0.0
        %604 = vmatpush1.msra.mxu0 0.0
        %605 = vmatprep.subr.mxu0 0.0
        %606 = vmatpush1.msra.mxu0 0.0
        %607 = vmatprep.subr.mxu0 0.0
        %608 = vmatpush1.msra.mxu0 0.0
        %609 = vmatprep.subr.mxu0 0.0
        %610 = vmatpush1.msra.mxu0 0.0
        %611 = vmatprep.subr.mxu0 0.0
        %612 = vmatpush1.msra.mxu0 0.0
        %613 = vmatprep.subr.mxu0 0.0
        %614 = vmatpush1.msra.mxu0 0.0
        %615 = vmatprep.subr.mxu0 0.0
        %616 = vmatpush1.msra.mxu0 0.0
        %617 = vmatprep.subr.mxu0 0.0
        %618 = vmatpush1.msra.mxu0 0.0
        %619 = vmatprep.subr.mxu0 0.0
        %620 = vmatpush1.msra.mxu0 0.0
        %621 = vmatprep.subr.mxu0 0.0
        %622 = vmatpush1.msra.mxu0 0.0
        %623 = vmatprep.subr.mxu0 0.0
        %624 = vmatpush1.msra.mxu0 0.0
        %625 = vmatprep.subr.mxu0 0.0
        %626 = vmatpush1.msra.mxu0 0.0
        %627 = vmatprep.subr.mxu0 0.0
        %628 = vmatpush1.msra.mxu0 0.0
        %629 = vmatprep.subr.mxu0 0.0
        %630 = vmatpush1.msra.mxu0 0.0
        %631 = vmatprep.subr.mxu0 0.0
        %632 = vmatpush1.msra.mxu0 0.0
        %633 = vmatprep.subr.mxu0 0.0
        %634 = vmatpush1.msra.mxu0 0.0
        %635 = vmatprep.subr.mxu0 0.0
        %636 = vmatpush1.msra.mxu0 0.0
        %637 = vmatprep.subr.mxu0 0.0
        %638 = vmatpush1.msra.mxu0 0.0
        %639 = vmatprep.subr.mxu0 0.0
        %640 = vmatpush1.msra.mxu0 0.0
        %641 = vmatprep.subr.mxu0 0.0
        %642 = vmatpush1.msra.mxu0 0.0
        %643 = vmatprep.subr.mxu0 0.0
        %644 = vmatpush1.msra.mxu0 0.0
        %645 = vmatprep.subr.mxu0 0.0
        %646 = vmatpush1.msra.mxu0 0.0
        %647 = vmatprep.subr.mxu0 0.0
        %648 = vmatpush1.msra.mxu0 0.0
        %649 = vmatprep.mubr.f32.mxu0 0.0
        %650 = vmatmul.mubr.f32.gmra.mrb[0].mxu0 %v432
        %v651 = vpop.f32.mrb[0].mxu0
        %v652 = vadd.f32 0.0, %v651
        %v653 = vpop.f32.mrb[0].mxu0
        %654 = vdwg.mxu0
        %655 = vst.msk [vmem:[%s371] sm:$0xff] %vm504, %v652
        %s656 = sand.u32 %s183, 1
        %s657 = scalar_lea.sflag [#allocation4], %s656
        %s658 = sand.u32 %s183, 1
        %s659 = smul.addr %s658, 8
        %s660 = scalar_lea.vmem [#allocation3], %s659
        %s661 = sand.u32 %s25, 1
        %s662 = scalar_lea.sflag [#allocation6], %s661
        %s663 = sand.u32 %s213, 1
        %s664 = smul.addr %s663, 8
        %s665 = scalar_lea.vmem [#allocation5], %s664
        %s666 = sand.u32 %s25, 1
        %s667 = scalar_lea.sflag [#allocation6], %s666
        %s668 = sand.u32 %s243, 1
        %s669 = smul.addr %s668, 8
        %s670 = scalar_lea.vmem [#allocation7], %s669
        // Predicated region
        $region45: #{tpu_custom_call.1} parent=39 // pred_check
          %p671 = pneg %p193
        $region46: #{tpu_custom_call.1} parent=39 // pred_check_branch
          %673 = sbr.rel (%p671) target = $region48
        $region47: #{tpu_custom_call.1} parent=39 // pred_region
          %s675 = ssub.s32 128, 128
          %676 = vsyncadd %s657, %s675
          %s677 = sadd.s32 %s31, %s32
          %s678 = smul.addr %s30, 4
          %s679 = sadd.s32 %s677, %s678
          %s680 = smul.addr %s679, 128
          %s681 = scalar_lea.hbm %s5, %s680
          %s683 = sshll.u32 %s660, 4
          %s684 = int_to_ptr.vmem [resolvable:$true] %s683
          %686 = dma.vmem_to_hbm [thread:$0]  %s684, 128, %s681, %s657
        $region48: #{tpu_custom_call.1} parent=39 // pred_fallthru
          _
        // Predicated region
        $region49: #{tpu_custom_call.1} parent=39 // pred_check
          %p687 = pneg %p223
        $region50: #{tpu_custom_call.1} parent=39 // pred_check_branch
          %689 = sbr.rel (%p687) target = $region52
        $region51: #{tpu_custom_call.1} parent=39 // pred_region
          %s691 = ssub.s32 128, 128
          %692 = vsyncadd %s662, %s691
          %s693 = sadd.s32 %s31, %s32
          %s694 = smul.addr %s30, 4
          %s695 = sadd.s32 %s693, %s694
          %s696 = smul.addr %s695, 128
          %s697 = scalar_lea.hbm %s6, %s696
          %s699 = sshll.u32 %s665, 4
          %s700 = int_to_ptr.vmem [resolvable:$true] %s699
          %702 = dma.vmem_to_hbm [thread:$0]  %s700, 128, %s697, %s662
        $region52: #{tpu_custom_call.1} parent=39 // pred_fallthru
          _
        // Predicated region
        $region53: #{tpu_custom_call.1} parent=39 // pred_check
          %p703 = pneg %p253
        $region54: #{tpu_custom_call.1} parent=39 // pred_check_branch
          %705 = sbr.rel (%p703) target = $region56
        $region55: #{tpu_custom_call.1} parent=39 // pred_region
          %s707 = ssub.s32 128, 128
          %708 = vsyncadd %s667, %s707
          %s709 = sadd.s32 %s31, %s32
          %s710 = smul.addr %s30, 4
          %s711 = sadd.s32 %s709, %s710
          %s712 = smul.addr %s711, 128
          %s713 = scalar_lea.hbm %s7, %s712
          %s715 = sshll.u32 %s670, 4
          %s716 = int_to_ptr.vmem [resolvable:$true] %s715
          %718 = dma.vmem_to_hbm [thread:$0]  %s716, 128, %s713, %s667
        $region56: #{tpu_custom_call.1} parent=39 // pred_fallthru
          _
      $region40: #{tpu_custom_call.1} parent=5 // pred_fallthru
        _
      %p719 = scmp.le.s32.totalorder 2, %s20
      // Predicated region
      $region57: #{tpu_custom_call.1} parent=5 // pred_check
        %p720 = pneg %p719
      $region58: #{tpu_custom_call.1} parent=5 // pred_check_branch
        %722 = sbr.rel (%p720) target = $region60
      $region59: #{tpu_custom_call.1} parent=5 // pred_region
        %s723 = ssub.s32 %s20, 2
        // Predicated region
        $region61: #{tpu_custom_call.1} parent=59 // pred_check
          %p724 = pneg %p199
        $region62: #{tpu_custom_call.1} parent=59 // pred_check_branch
          %726 = sbr.rel (%p724) target = $region64
        $region63: #{tpu_custom_call.1} parent=59 // pred_region
          %s727 = sand.u32 %s184, 1
          %s728 = scalar_lea.sflag [#allocation4], %s727
          %s729 = sand.u32 %s184, 1
          %s730 = smul.addr %s729, 8
          %s731 = scalar_lea.vmem [#allocation3], %s730
          %732 = dma.done %s728, 128
        $region64: #{tpu_custom_call.1} parent=59 // pred_fallthru
          _
        // Predicated region
        $region65: #{tpu_custom_call.1} parent=59 // pred_check
          %p733 = pneg %p229
        $region66: #{tpu_custom_call.1} parent=59 // pred_check_branch
          %735 = sbr.rel (%p733) target = $region68
        $region67: #{tpu_custom_call.1} parent=59 // pred_region
          %s736 = sand.u32 %s26, 1
          %s737 = scalar_lea.sflag [#allocation6], %s736
          %s738 = sand.u32 %s214, 1
          %s739 = smul.addr %s738, 8
          %s740 = scalar_lea.vmem [#allocation5], %s739
          %741 = dma.done %s737, 128
        $region68: #{tpu_custom_call.1} parent=59 // pred_fallthru
          _
        // Predicated region
        $region69: #{tpu_custom_call.1} parent=59 // pred_check
          %p742 = pneg %p259
        $region70: #{tpu_custom_call.1} parent=59 // pred_check_branch
          %744 = sbr.rel (%p742) target = $region72
        $region71: #{tpu_custom_call.1} parent=59 // pred_region
          %s745 = sand.u32 %s26, 1
          %s746 = scalar_lea.sflag [#allocation6], %s745
          %s747 = sand.u32 %s244, 1
          %s748 = smul.addr %s747, 8
          %s749 = scalar_lea.vmem [#allocation7], %s748
          %750 = dma.done %s746, 128
        $region72: #{tpu_custom_call.1} parent=59 // pred_fallthru
          _
      $region60: #{tpu_custom_call.1} parent=5 // pred_fallthru
        _
    $region6: #{tpu_custom_call.1} parent=1 // loop_footer
      %s24 = sadd.s32 1, %s20
    $region7: #{tpu_custom_call.1} parent=1 // loop_footer_branch
      %19 = sbr.rel target = $region3
    $region8: #{tpu_custom_call.1} parent=1 // loop_exit
      _
    %751 = vsyncpa [#allocation4], 1
    %s752 = scalar_lea.sflag [#allocation4], 1
    %753 = vsyncpa %s752, 1
    %754 = vsyncpa [#allocation6], 1
    %s755 = scalar_lea.sflag [#allocation6], 1
    %756 = vsyncpa %s755, 1

</llo_original>
